<compile_context>
chip_gen: v6e
topology: v6e:2x2x1
jax: 0.10.0
libtpu: 0.0.40
codegen_flags: <defaults>
</compile_context>

<pallas_src>
import jax
import jax.numpy as jnp
from jax.experimental import pallas as pl
from jax.experimental.pallas import tpu as pltpu


def mlp_critic_kernel(x_ref, w1t_ref, b1_ref, w2t_ref, b2_ref, w3_ref, b3_ref,
                      out_ref):
    # obs tile: (TILE_B, obs_dim) f32 -> bf16 on the VPU (ample slack there).
    x = x_ref[...].astype(jnp.bfloat16)
    # Layer 1, feature-major via NT contraction over obs_dim:
    #   (h1, obs_dim) . (TILE_B, obs_dim)^T -> (h1, TILE_B), f32 accumulate.
    h = jax.lax.dot_general(w1t_ref[...], x, (((1,), (1,)), ((), ())),
                            preferred_element_type=jnp.float32)
    h = jnp.tanh(h + b1_ref[...])                       # b1: (h1, 1), f32
    # Layer 2: (h2, h1) @ (h1, TILE_B) -> (h2, TILE_B), bf16 MXU, f32 acc.
    h = jnp.dot(w2t_ref[...], h.astype(jnp.bfloat16),
                preferred_element_type=jnp.float32)
    h = jnp.tanh(h + b2_ref[...])                       # b2: (h2, 1), f32
    # Output layer: (1, h2) @ (h2, TILE_B) -> (1, TILE_B); lane-dense store.
    v = jnp.dot(w3_ref[...], h.astype(jnp.bfloat16),
                preferred_element_type=jnp.float32)
    out_ref[...] = (v + b3_ref[0, 0]).astype(out_ref.dtype)


def _round_up(x, m):
    return pl.cdiv(x, m) * m


def mlp_critic_forward(obs, params, *, tile_b=None):
    """obs: (B, obs_dim) float32; params: 3 x (W:(in,out), b:(1,out)).

    Returns (B,) float32, matching torch.squeeze(v_net(obs), -1).
    """
    (w1, b1), (w2, b2), (w3, b3) = params
    obs = jnp.asarray(obs, jnp.float32)
    B, obs_dim = obs.shape
    h1 = w1.shape[1]
    h2 = w2.shape[1]

    # Batch tile: multiple of 128 (lane-dense), >= 2 grid steps when B > 128
    # (v7x dual-TC), capped at 4096 rows. VMEM is not the constraint here.
    if tile_b is None:
        n_steps = max(2, pl.cdiv(B, 4096))
        tile_b = max(128, min(4096, _round_up(pl.cdiv(B, n_steps), 128)))
    else:
        tile_b = max(128, _round_up(tile_b, 128))
    grid = (pl.cdiv(B, tile_b),)

    # Tiny weight prep (done once, negligible): W^T in bf16, biases f32
    # feature-major (h, 1), scalar output bias (1, 1) for SMEM.
    w1t = jnp.asarray(w1, jnp.float32).T.astype(jnp.bfloat16)      # (h1, obs_dim)
    w2t = jnp.asarray(w2, jnp.float32).T.astype(jnp.bfloat16)      # (h2, h1)
    w3r = jnp.asarray(w3, jnp.float32).reshape(1, h2).astype(jnp.bfloat16)
    b1c = jnp.asarray(b1, jnp.float32).reshape(h1, 1)
    b2c = jnp.asarray(b2, jnp.float32).reshape(h2, 1)
    b3s = jnp.asarray(b3, jnp.float32).reshape(1, 1)

    out = pl.pallas_call(
        mlp_critic_kernel,
        out_shape=jax.ShapeDtypeStruct((1, B), jnp.float32),
        grid=grid,
        in_specs=[
            # obs: streamed raw-f32 batch tiles (auto double-buffered DMA);
            # the ragged last tile is clipped by Pallas.
            pl.BlockSpec((tile_b, obs_dim), lambda i: (i, 0)),
            # Weights / biases: whole arrays, VMEM-resident across the grid.
            pl.BlockSpec((h1, obs_dim), lambda i: (0, 0)),
            pl.BlockSpec((h1, 1), lambda i: (0, 0)),
            pl.BlockSpec((h2, h1), lambda i: (0, 0)),
            pl.BlockSpec((h2, 1), lambda i: (0, 0)),
            pl.BlockSpec((1, h2), lambda i: (0, 0)),
            # Scalar output bias: SMEM (no VMEM block / DMA machinery).
            pl.BlockSpec(memory_space=pltpu.MemorySpace.SMEM),
        ],
        # Lane-dense output row: (1, TILE_B) block of the (1, B) result.
        out_specs=pl.BlockSpec((1, tile_b), lambda i: (0, i)),
        compiler_params=pltpu.CompilerParams(
            dimension_semantics=("parallel",)),
    )(obs, w1t, b1c, w2t, b2c, w3r, b3s)

    # (1, B) -> (B,)  == torch.squeeze(..., -1).
    return out[0]


def init_mlp_critic_params(key, obs_dim, hidden_sizes):
    """Deterministic init of Linear layers with shapes from the module."""
    sizes = [obs_dim] + list(hidden_sizes) + [1]
    params = []
    for j in range(len(sizes) - 1):
        fan_in, fan_out = sizes[j], sizes[j + 1]
        key, wk, bk = jax.random.split(key, 3)
        bound = 1.0 / jnp.sqrt(jnp.float32(fan_in))
        # Stored pre-transposed: (in_features, out_features).
        w = jax.random.uniform(wk, (fan_in, fan_out), jnp.float32, -bound, bound)
        b = jax.random.uniform(bk, (1, fan_out), jnp.float32, -bound, bound)
        params.append((w, b))
    return params


def _reference_forward(obs, params):
    h = obs
    for i, (w, b) in enumerate(params):
        h = h @ w + b
        if i < len(params) - 1:
            h = jnp.tanh(h)
    return jnp.squeeze(h, -1)


if __name__ == "__main__":
    key = jax.random.PRNGKey(0)
    obs_dim = 16
    hidden_sizes = (32, 32)

    key, pkey, okey, okey2 = jax.random.split(key, 4)
    params = init_mlp_critic_params(pkey, obs_dim, hidden_sizes)

    # Small batch: single ragged 128-row tile (block > array, clipped).
    B = 8
    obs = jax.random.normal(okey, (B, obs_dim), jnp.float32)
    v = mlp_critic_forward(obs, params)
    jax.block_until_ready(v)
    v_ref = _reference_forward(obs, params)
    assert v.shape == (B,), v.shape
    # bf16 matmul operands loosen the tolerance vs the f32 reference.
    assert jnp.allclose(v, v_ref, atol=5e-2, rtol=5e-2), "mismatch (small batch)"

    # Larger batch exercising a multi-step grid with a ragged edge block.
    B2 = 300
    obs2 = jax.random.normal(okey2, (B2, obs_dim), jnp.float32)
    v2 = mlp_critic_forward(obs2, params, tile_b=128)
    jax.block_until_ready(v2)
    v2_ref = _reference_forward(obs2, params)
    assert v2.shape == (B2,), v2.shape
    assert jnp.allclose(v2, v2_ref, atol=5e-2, rtol=5e-2), "mismatch (grid batch)"

    # Default tile selection path (>= 2 grid steps for dual-TC chips).
    v3 = mlp_critic_forward(obs2, params)
    jax.block_until_ready(v3)
    assert jnp.allclose(v3, v2_ref, atol=5e-2, rtol=5e-2), "mismatch (auto tile)"

    print("KERNEL_OK")
</pallas_src>

<mosaic_0001>
module attributes {stable_mosaic.version = 11 : i64} {
  func.func @mlp_critic_kernel(%arg0: i32, %arg1: memref<128x16xf32, #tpu.memory_space<vmem>>, %arg2: memref<32x16xbf16, #tpu.memory_space<vmem>>, %arg3: memref<32x1xf32, #tpu.memory_space<vmem>>, %arg4: memref<32x32xbf16, #tpu.memory_space<vmem>>, %arg5: memref<32x1xf32, #tpu.memory_space<vmem>>, %arg6: memref<1x32xbf16, #tpu.memory_space<vmem>>, %arg7: memref<1x1xf32, #tpu.memory_space<smem>>, %arg8: memref<1x128xf32, #tpu.memory_space<vmem>>) attributes {dimension_semantics = [#tpu.dimension_semantics<parallel>], iteration_bounds = array<i64: 1>, scalar_prefetch = 0 : i64, scratch_operands = 0 : i64, tpu.core_type = #tpu.core_type<tc>, window_params = [{transform_indices = @transform_0, window_bounds = array<i64: 128, 16>}, {pipeline_mode = #tpu.pipeline_mode<synchronous>, transform_indices = @transform_1, window_bounds = array<i64: 32, 16>}, {pipeline_mode = #tpu.pipeline_mode<synchronous>, transform_indices = @transform_2, window_bounds = array<i64: 32, 1>}, {pipeline_mode = #tpu.pipeline_mode<synchronous>, transform_indices = @transform_3, window_bounds = array<i64: 32, 32>}, {pipeline_mode = #tpu.pipeline_mode<synchronous>, transform_indices = @transform_4, window_bounds = array<i64: 32, 1>}, {pipeline_mode = #tpu.pipeline_mode<synchronous>, transform_indices = @transform_5, window_bounds = array<i64: 1, 32>}, {transform_indices = @transform_6, window_bounds = array<i64: 1, 1>}, {transform_indices = @transform_7, window_bounds = array<i64: 1, 128>}]} {
    %c0 = arith.constant 0 : index
    %c0_0 = arith.constant 0 : index
    %0 = vector.load %arg1[%c0, %c0_0] : memref<128x16xf32, #tpu.memory_space<vmem>>, vector<128x16xf32>
    %1 = arith.truncf %0 : vector<128x16xf32> to vector<128x16xbf16>
    %c0_1 = arith.constant 0 : index
    %c0_2 = arith.constant 0 : index
    %2 = vector.load %arg2[%c0_1, %c0_2] : memref<32x16xbf16, #tpu.memory_space<vmem>>, vector<32x16xbf16>
    %cst = arith.constant dense<0.000000e+00> : vector<32x128xf32>
    %3 = tpu.matmul %2, %1, %cst {dimension_numbers = #tpu.dot_dimension_numbers<[1], [1], [0], [0], [0, 0, 1, 0], [], []>} : vector<32x16xbf16>, vector<128x16xbf16>, vector<32x128xf32> -> vector<32x128xf32>
    %c0_3 = arith.constant 0 : index
    %c0_4 = arith.constant 0 : index
    %4 = vector.load %arg3[%c0_3, %c0_4] : memref<32x1xf32, #tpu.memory_space<vmem>>, vector<32x1xf32>
    %5 = vector.broadcast %4 : vector<32x1xf32> to vector<32x128xf32>
    %6 = arith.addf %3, %5 : vector<32x128xf32>
    %7 = math.tanh %6 : vector<32x128xf32>
    %c0_5 = arith.constant 0 : index
    %c0_6 = arith.constant 0 : index
    %8 = vector.load %arg4[%c0_5, %c0_6] : memref<32x32xbf16, #tpu.memory_space<vmem>>, vector<32x32xbf16>
    %9 = arith.truncf %7 : vector<32x128xf32> to vector<32x128xbf16>
    %cst_7 = arith.constant dense<0.000000e+00> : vector<32x128xf32>
    %10 = tpu.matmul %8, %9, %cst_7 {dimension_numbers = #tpu.dot_dimension_numbers<[1], [0], [0], [1], [0, 0, 1, 1], [], []>} : vector<32x32xbf16>, vector<32x128xbf16>, vector<32x128xf32> -> vector<32x128xf32>
    %c0_8 = arith.constant 0 : index
    %c0_9 = arith.constant 0 : index
    %11 = vector.load %arg5[%c0_8, %c0_9] : memref<32x1xf32, #tpu.memory_space<vmem>>, vector<32x1xf32>
    %12 = vector.broadcast %11 : vector<32x1xf32> to vector<32x128xf32>
    %13 = arith.addf %10, %12 : vector<32x128xf32>
    %14 = math.tanh %13 : vector<32x128xf32>
    %c0_10 = arith.constant 0 : index
    %c0_11 = arith.constant 0 : index
    %15 = vector.load %arg6[%c0_10, %c0_11] : memref<1x32xbf16, #tpu.memory_space<vmem>>, vector<1x32xbf16>
    %16 = arith.truncf %14 : vector<32x128xf32> to vector<32x128xbf16>
    %cst_12 = arith.constant dense<0.000000e+00> : vector<1x128xf32>
    %17 = tpu.matmul %15, %16, %cst_12 {dimension_numbers = #tpu.dot_dimension_numbers<[1], [0], [0], [1], [0, 0, 1, 1], [], []>} : vector<1x32xbf16>, vector<32x128xbf16>, vector<1x128xf32> -> vector<1x128xf32>
    %c0_13 = arith.constant 0 : index
    %c0_14 = arith.constant 0 : index
    %18 = memref.load %arg7[%c0_13, %c0_14] : memref<1x1xf32, #tpu.memory_space<smem>>
    %19 = vector.broadcast %18 : f32 to vector<1x128xf32>
    %20 = arith.addf %17, %19 : vector<1x128xf32>
    %c0_15 = arith.constant 0 : index
    %c0_16 = arith.constant 0 : index
    %21 = vector.load %arg8[%c0_15, %c0_16] : memref<1x128xf32, #tpu.memory_space<vmem>>, vector<1x128xf32>
    tpu.vector_store %arg8[%c0_15, %c0_16], %20 {strides = array<i32>} : memref<1x128xf32, #tpu.memory_space<vmem>>, vector<1x128xf32>,
    return
  }
  func.func @transform_0(%arg0: i32) -> (i32, i32) {
    %c0_i32 = arith.constant 0 : i32
    %c0_i32_0 = arith.constant 0 : i32
    return %arg0, %c0_i32 : i32, i32
  }
  func.func @transform_1(%arg0: i32) -> (i32, i32) {
    %c0_i32 = arith.constant 0 : i32
    %c0_i32_0 = arith.constant 0 : i32
    %c0_i32_1 = arith.constant 0 : i32
    return %c0_i32, %c0_i32_0 : i32, i32
  }
  func.func @transform_2(%arg0: i32) -> (i32, i32) {
    %c0_i32 = arith.constant 0 : i32
    %c0_i32_0 = arith.constant 0 : i32
    %c0_i32_1 = arith.constant 0 : i32
    return %c0_i32, %c0_i32_0 : i32, i32
  }
  func.func @transform_3(%arg0: i32) -> (i32, i32) {
    %c0_i32 = arith.constant 0 : i32
    %c0_i32_0 = arith.constant 0 : i32
    %c0_i32_1 = arith.constant 0 : i32
    return %c0_i32, %c0_i32_0 : i32, i32
  }
  func.func @transform_4(%arg0: i32) -> (i32, i32) {
    %c0_i32 = arith.constant 0 : i32
    %c0_i32_0 = arith.constant 0 : i32
    %c0_i32_1 = arith.constant 0 : i32
    return %c0_i32, %c0_i32_0 : i32, i32
  }
  func.func @transform_5(%arg0: i32) -> (i32, i32) {
    %c0_i32 = arith.constant 0 : i32
    %c0_i32_0 = arith.constant 0 : i32
    %c0_i32_1 = arith.constant 0 : i32
    return %c0_i32, %c0_i32_0 : i32, i32
  }
  func.func @transform_6(%arg0: i32) -> (i32, i32) {
    %c0_i32 = arith.constant 0 : i32
    %c0_i32_0 = arith.constant 0 : i32
    %c0_i32_1 = arith.constant 0 : i32
    return %c0_i32, %c0_i32_0 : i32, i32
  }
  func.func @transform_7(%arg0: i32) -> (i32, i32) {
    %c0_i32 = arith.constant 0 : i32
    %c0_i32_0 = arith.constant 0 : i32
    return %c0_i32, %arg0 : i32, i32
  }
}

</mosaic_0001>

<llo_original>
// kernel: tpu_custom_call.1
$region0: #{tpu_custom_call.1}
  #allocation0 [shape = 'u32[]', space=smem, size = 0x4, offset = 0x4, fixed_abs, tag = 'smem constant byte address 0x4 - core index']
  #allocation1 [shape = 'u32[144,128]{1,0:T(1,128)}', space=vmem, size = 0x12000, scoped, tag = 'internal scratch']
  #allocation2 [shape = 'f32[1,1]{1,0:T(1,128)S(6)}', space=smem, size = 0x200, scoped, tag = 'scoped memory for tpu_custom_call.1']
  %s0 = inlined_call_operand.vmem [shape: f32[8,16], index: 0, kind: input, shape index: {}]
  %s1 = inlined_call_operand.vmem [shape: bf16[32,16], index: 1, kind: input, shape index: {}]
  %s2 = inlined_call_operand.vmem [shape: f32[32,1], index: 2, kind: input, shape index: {}]
  %s3 = inlined_call_operand.vmem [shape: bf16[32,32], index: 3, kind: input, shape index: {}]
  %s4 = inlined_call_operand.vmem [shape: f32[32,1], index: 4, kind: input, shape index: {}]
  %s5 = inlined_call_operand.vmem [shape: bf16[1,32], index: 5, kind: input, shape index: {}]
  %s6 = inlined_call_operand.<no memory space> [shape: f32[1,1], index: 6, kind: input, shape index: {}]
  %s7 = inlined_call_operand.hbm [shape: f32[1,8], index: 7, kind: output, shape index: {}]
  %s8 = sld [smem:[#allocation0]]
  $region38: #{tpu_custom_call.1} parent=0
    _
  %s10 = ssub.s32 1, %s8
  %s11 = scalar_select 0, %s10, %s8
  %12 = sst [smem:[#allocation2]] %s6
  $region1: #{tpu_custom_call.1} parent=0
    #allocation3 [shape = 'u8[512]{0}', space=vmem, size = 0x400, scoped, tag = 'output window, operand 0, single buffered']
    #allocation4 [shape = 's32[1]{0}', space=sflag, size = 0x4, scoped, tag = 'scoped memory for tpu_custom_call.1']
    %13 = vsyncpa [#allocation4], 0
    // Predicated region
    $region2: #{tpu_custom_call.1} parent=1 // pred_check
      _
    $region3: #{tpu_custom_call.1} parent=1 // pred_check_branch
      %15 = sbr.rel (0) target = $region5
    $region4: #{tpu_custom_call.1} parent=1 // pred_region
      _
    $region5: #{tpu_custom_call.1} parent=1 // pred_fallthru
      _
    // Predicated region
    $region6: #{tpu_custom_call.1} parent=1 // pred_check
      _
    $region7: #{tpu_custom_call.1} parent=1 // pred_check_branch
      %17 = sbr.rel (0) target = $region9
    $region8: #{tpu_custom_call.1} parent=1 // pred_region
      _
    $region9: #{tpu_custom_call.1} parent=1 // pred_fallthru
      _
    // Predicated region
    $region10: #{tpu_custom_call.1} parent=1 // pred_check
      _
    $region11: #{tpu_custom_call.1} parent=1 // pred_check_branch
      %19 = sbr.rel (0) target = $region13
    $region12: #{tpu_custom_call.1} parent=1 // pred_region
      _
    $region13: #{tpu_custom_call.1} parent=1 // pred_fallthru
      _
    // Predicated region
    $region14: #{tpu_custom_call.1} parent=1 // pred_check
      _
    $region15: #{tpu_custom_call.1} parent=1 // pred_check_branch
      %21 = sbr.rel (0) target = $region17
    $region16: #{tpu_custom_call.1} parent=1 // pred_region
      _
    $region17: #{tpu_custom_call.1} parent=1 // pred_fallthru
      _
    // Predicated region
    $region18: #{tpu_custom_call.1} parent=1 // pred_check
      _
    $region19: #{tpu_custom_call.1} parent=1 // pred_check_branch
      %23 = sbr.rel (0) target = $region21
    $region20: #{tpu_custom_call.1} parent=1 // pred_region
      _
    $region21: #{tpu_custom_call.1} parent=1 // pred_fallthru
      _
    // Predicated region
    $region22: #{tpu_custom_call.1} parent=1 // pred_check
      _
    $region23: #{tpu_custom_call.1} parent=1 // pred_check_branch
      %25 = sbr.rel (0) target = $region25
    $region24: #{tpu_custom_call.1} parent=1 // pred_region
      _
    $region25: #{tpu_custom_call.1} parent=1 // pred_fallthru
      _
    // Predicated region
    $region26: #{tpu_custom_call.1} parent=1 // pred_check
      _
    $region27: #{tpu_custom_call.1} parent=1 // pred_check_branch
      %27 = sbr.rel (0) target = $region29
    $region28: #{tpu_custom_call.1} parent=1 // pred_region
      _
    $region29: #{tpu_custom_call.1} parent=1 // pred_fallthru
      _
    %v29 = vld [vmem:[%s0] sm:$0xff]
    %v30 = vld [vmem:[%s0 + $0x8] sm:$0xff]
    %v31 = vld [vmem:[%s0 + $0x10] sm:$0xff]
    %v32 = vld [vmem:[%s0 + $0x18] sm:$0xff]
    %v33 = vld [vmem:[%s0 + $0x20] sm:$0xff]
    %v34 = vld [vmem:[%s0 + $0x28] sm:$0xff]
    %v35 = vld [vmem:[%s0 + $0x30] sm:$0xff]
    %v36 = vld [vmem:[%s0 + $0x38] sm:$0xff]
    %v37 = vld [vmem:[%s0 + $0x40] sm:$0xff]
    %v38 = vld [vmem:[%s0 + $0x48] sm:$0xff]
    %v39 = vld [vmem:[%s0 + $0x50] sm:$0xff]
    %v40 = vld [vmem:[%s0 + $0x58] sm:$0xff]
    %v41 = vld [vmem:[%s0 + $0x60] sm:$0xff]
    %v42 = vld [vmem:[%s0 + $0x68] sm:$0xff]
    %v43 = vld [vmem:[%s0 + $0x70] sm:$0xff]
    %v44 = vld [vmem:[%s0 + $0x78] sm:$0xff]
    %v45 = vpack.c.bf16 %v30, %v29
    %v46 = vpack.c.bf16 %v32, %v31
    %v47 = vpack.c.bf16 %v34, %v33
    %v48 = vpack.c.bf16 %v36, %v35
    %v49 = vpack.c.bf16 %v38, %v37
    %v50 = vpack.c.bf16 %v40, %v39
    %v51 = vpack.c.bf16 %v42, %v41
    %v52 = vpack.c.bf16 %v44, %v43
    %v53 = vld [vmem:[%s1] sm:$0xf]
    %v54 = vld [vmem:[%s1 + $0x4] sm:$0xf]
    %v55 = vld [vmem:[%s1 + $0x8] sm:$0xf]
    %v56 = vld [vmem:[%s1 + $0xc] sm:$0xf]
    %v57 = vld [vmem:[%s2] sm:$0xff]
    %v58 = vld [vmem:[%s2 + $0x8] sm:$0xff]
    %v59 = vld [vmem:[%s2 + $0x10] sm:$0xff]
    %v60 = vld [vmem:[%s2 + $0x18] sm:$0xff]
    %62 = vset.pattern.permute.xlu0 0
    %63 = vperm.xlu0 %62, %v57
    %v64 = vpop.permute.xlu0 %63
    %67 = vset.pattern.permute.xlu0 0
    %68 = vperm.xlu0 %67, %v58
    %v69 = vpop.permute.xlu0 %68
    %72 = vset.pattern.permute.xlu0 0
    %73 = vperm.xlu0 %72, %v59
    %v74 = vpop.permute.xlu0 %73
    %77 = vset.pattern.permute.xlu0 0
    %78 = vperm.xlu0 %77, %v60
    %v79 = vpop.permute.xlu0 %78
    %v85 = vunpack.c.l.b16 %v53
    %v86 = vunpack.c.l.b16 %v54
    %v87 = vunpack.c.l.b16 %v55
    %v88 = vunpack.c.l.b16 %v56
    %v89 = vpack.c.b16 %v86, %v85
    %v90 = vpack.c.b16 %v88, %v87
    %vm91 = vcmask 130048
    %v93 = vsel %vm91, %v89, 0
    %v96 = vsel %vm91, %v90, 0
    %v99 = vsel %vm91, %v45, 0
    %v102 = vsel %vm91, %v46, 0
    %v105 = vsel %vm91, %v47, 0
    %v108 = vsel %vm91, %v48, 0
    %v111 = vsel %vm91, %v49, 0
    %v114 = vsel %vm91, %v50, 0
    %v117 = vsel %vm91, %v51, 0
    %v120 = vsel %vm91, %v52, 0
    %122 = vmatprep.subr.bf16.mxu0 0
    %123 = vmatpush1.bf16.xpose.msra.mxu0 %v120
    %124 = vmatprep.subr.bf16.mxu0 0
    %125 = vmatpush1.bf16.xpose.msra.mxu0 %v117
    %126 = vmatprep.subr.bf16.mxu0 0
    %127 = vmatpush1.bf16.xpose.msra.mxu0 %v114
    %128 = vmatprep.subr.bf16.mxu0 0
    %129 = vmatpush1.bf16.xpose.msra.mxu0 %v111
    %130 = vmatprep.subr.bf16.mxu0 0
    %131 = vmatpush1.bf16.xpose.msra.mxu0 %v108
    %132 = vmatprep.subr.bf16.mxu0 0
    %133 = vmatpush1.bf16.xpose.msra.mxu0 %v105
    %134 = vmatprep.subr.bf16.mxu0 0
    %135 = vmatpush1.bf16.xpose.msra.mxu0 %v102
    %136 = vmatprep.subr.bf16.mxu0 0
    %137 = vmatpush1.bf16.xpose.msra.mxu0 %v99
    %138 = vmatprep.subr.bf16.mxu0 0
    %139 = vmatpush2.bf16.xpose.msra.mxu0 0
    %140 = vmatprep.subr.bf16.mxu0 0
    %141 = vmatpush2.bf16.xpose.msra.mxu0 0
    %142 = vmatprep.subr.bf16.mxu0 0
    %143 = vmatpush2.bf16.xpose.msra.mxu0 0
    %144 = vmatprep.subr.bf16.mxu0 0
    %145 = vmatpush2.bf16.xpose.msra.mxu0 0
    %146 = vmatprep.subr.bf16.mxu0 0
    %147 = vmatpush2.bf16.xpose.msra.mxu0 0
    %148 = vmatprep.subr.bf16.mxu0 0
    %149 = vmatpush2.bf16.xpose.msra.mxu0 0
    %150 = vmatprep.subr.bf16.mxu0 0
    %151 = vmatpush2.bf16.xpose.msra.mxu0 0
    %152 = vmatprep.subr.bf16.mxu0 0
    %153 = vmatpush2.bf16.xpose.msra.mxu0 0
    %154 = vmatprep.mubr.bf16.mxu0 0
    %155 = vmatmul.mubr.bf16.gmra.mxu0 %v93
    %v156 = vpop.f32.mrf.mxu0
    %v157 = vadd.f32 %v64, %v156
    %v158 = vpop.f32.mrf.mxu0
    %v159 = vpop.f32.mrf.mxu0
    %v160 = vadd.f32 %v69, %v159
    %v161 = vpop.f32.mrf.mxu0
    %162 = vmatprep.mubr.bf16.mxu0 0
    %163 = vmatmul.mubr.bf16.gmra.mxu0 %v96
    %v164 = vpop.f32.mrf.mxu0
    %v165 = vadd.f32 %v74, %v164
    %v166 = vpop.f32.mrf.mxu0
    %v167 = vpop.f32.mrf.mxu0
    %v168 = vadd.f32 %v79, %v167
    %v169 = vpop.f32.mrf.mxu0
    %170 = vdwg.mxu0
    %v171 = vtanh.pop %v157
    %v172 = vtanh.pop %v160
    %v173 = vtanh.pop %v165
    %v174 = vtanh.pop %v168
    %v175 = vld [vmem:[%s3] sm:$0xf]
    %v176 = vld [vmem:[%s3 + $0x4] sm:$0xf]
    %v177 = vld [vmem:[%s3 + $0x8] sm:$0xf]
    %v178 = vld [vmem:[%s3 + $0xc] sm:$0xf]
    %v179 = vpack.c.bf16 %v172, %v171
    %v180 = vpack.c.bf16 %v174, %v173
    %v181 = vld [vmem:[%s4] sm:$0xff]
    %v182 = vld [vmem:[%s4 + $0x8] sm:$0xff]
    %v183 = vld [vmem:[%s4 + $0x10] sm:$0xff]
    %v184 = vld [vmem:[%s4 + $0x18] sm:$0xff]
    %186 = vset.pattern.permute.xlu0 0
    %187 = vperm.xlu0 %186, %v181
    %v188 = vpop.permute.xlu0 %187
    %191 = vset.pattern.permute.xlu0 0
    %192 = vperm.xlu0 %191, %v182
    %v193 = vpop.permute.xlu0 %192
    %196 = vset.pattern.permute.xlu0 0
    %197 = vperm.xlu0 %196, %v183
    %v198 = vpop.permute.xlu0 %197
    %201 = vset.pattern.permute.xlu0 0
    %202 = vperm.xlu0 %201, %v184
    %v203 = vpop.permute.xlu0 %202
    %v209 = vunpack.c.l.b16 %v175
    %v210 = vunpack.c.l.b16 %v176
    %v211 = vunpack.c.l.b16 %v177
    %v212 = vunpack.c.l.b16 %v178
    %v213 = vpack.c.b16 %v210, %v209
    %v214 = vpack.c.b16 %v212, %v211
    %vm215 = vcmask 261120
    %v217 = vsel %vm215, %v213, 0
    %v220 = vsel %vm215, %v214, 0
    %222 = vmatprep.subr.bf16.mxu0 0
    %223 = vmatpush1.bf16.msra.mxu0 0
    %224 = vmatprep.subr.bf16.mxu0 0
    %225 = vmatpush1.bf16.msra.mxu0 0
    %226 = vmatprep.subr.bf16.mxu0 0
    %227 = vmatpush1.bf16.msra.mxu0 0
    %228 = vmatprep.subr.bf16.mxu0 0
    %229 = vmatpush1.bf16.msra.mxu0 0
    %230 = vmatprep.subr.bf16.mxu0 0
    %231 = vmatpush1.bf16.msra.mxu0 0
    %232 = vmatprep.subr.bf16.mxu0 0
    %233 = vmatpush1.bf16.msra.mxu0 0
    %234 = vmatprep.subr.bf16.mxu0 0
    %235 = vmatpush1.bf16.msra.mxu0 %v180
    %236 = vmatprep.subr.bf16.mxu0 0
    %237 = vmatpush1.bf16.msra.mxu0 %v179
    %238 = vmatprep.subr.bf16.mxu0 0
    %239 = vmatpush2.bf16.msra.mxu0 0
    %240 = vmatprep.subr.bf16.mxu0 0
    %241 = vmatpush2.bf16.msra.mxu0 0
    %242 = vmatprep.subr.bf16.mxu0 0
    %243 = vmatpush2.bf16.msra.mxu0 0
    %244 = vmatprep.subr.bf16.mxu0 0
    %245 = vmatpush2.bf16.msra.mxu0 0
    %246 = vmatprep.subr.bf16.mxu0 0
    %247 = vmatpush2.bf16.msra.mxu0 0
    %248 = vmatprep.subr.bf16.mxu0 0
    %249 = vmatpush2.bf16.msra.mxu0 0
    %250 = vmatprep.subr.bf16.mxu0 0
    %251 = vmatpush2.bf16.msra.mxu0 0
    %252 = vmatprep.subr.bf16.mxu0 0
    %253 = vmatpush2.bf16.msra.mxu0 0
    %254 = vmatprep.mubr.bf16.mxu0 0
    %255 = vmatmul.mubr.bf16.gmra.mxu0 %v217
    %v256 = vpop.f32.mrf.mxu0
    %v257 = vadd.f32 %v188, %v256
    %v258 = vpop.f32.mrf.mxu0
    %v259 = vpop.f32.mrf.mxu0
    %v260 = vadd.f32 %v193, %v259
    %v261 = vpop.f32.mrf.mxu0
    %262 = vmatprep.mubr.bf16.mxu0 0
    %263 = vmatmul.mubr.bf16.gmra.mxu0 %v220
    %v264 = vpop.f32.mrf.mxu0
    %v265 = vadd.f32 %v198, %v264
    %v266 = vpop.f32.mrf.mxu0
    %v267 = vpop.f32.mrf.mxu0
    %v268 = vadd.f32 %v203, %v267
    %v269 = vpop.f32.mrf.mxu0
    %270 = vdwg.mxu0
    %v271 = vtanh.pop %v257
    %v272 = vtanh.pop %v260
    %v273 = vtanh.pop %v265
    %v274 = vtanh.pop %v268
    %v275 = vld [vmem:[%s5] sm:$0x1]
    %v276 = vpack.c.bf16 %v272, %v271
    %v277 = vpack.c.bf16 %v274, %v273
    %s278 = sld [smem:[#allocation2]]
    %v279 = vstv %s278
    %v281 = vsel %vm215, %v275, 0
    %283 = vmatprep.subr.bf16.mxu0 0
    %284 = vmatpush1.bf16.msra.mxu0 0
    %285 = vmatprep.subr.bf16.mxu0 0
    %286 = vmatpush1.bf16.msra.mxu0 0
    %287 = vmatprep.subr.bf16.mxu0 0
    %288 = vmatpush1.bf16.msra.mxu0 0
    %289 = vmatprep.subr.bf16.mxu0 0
    %290 = vmatpush1.bf16.msra.mxu0 0
    %291 = vmatprep.subr.bf16.mxu0 0
    %292 = vmatpush1.bf16.msra.mxu0 0
    %293 = vmatprep.subr.bf16.mxu0 0
    %294 = vmatpush1.bf16.msra.mxu0 0
    %295 = vmatprep.subr.bf16.mxu0 0
    %296 = vmatpush1.bf16.msra.mxu0 %v277
    %297 = vmatprep.subr.bf16.mxu0 0
    %298 = vmatpush1.bf16.msra.mxu0 %v276
    %299 = vmatprep.subr.bf16.mxu0 0
    %300 = vmatpush2.bf16.msra.mxu0 0
    %301 = vmatprep.subr.bf16.mxu0 0
    %302 = vmatpush2.bf16.msra.mxu0 0
    %303 = vmatprep.subr.bf16.mxu0 0
    %304 = vmatpush2.bf16.msra.mxu0 0
    %305 = vmatprep.subr.bf16.mxu0 0
    %306 = vmatpush2.bf16.msra.mxu0 0
    %307 = vmatprep.subr.bf16.mxu0 0
    %308 = vmatpush2.bf16.msra.mxu0 0
    %309 = vmatprep.subr.bf16.mxu0 0
    %310 = vmatpush2.bf16.msra.mxu0 0
    %311 = vmatprep.subr.bf16.mxu0 0
    %312 = vmatpush2.bf16.msra.mxu0 0
    %313 = vmatprep.subr.bf16.mxu0 0
    %314 = vmatpush2.bf16.msra.mxu0 0
    %315 = vmatprep.mubr.bf16.mxu0 0
    %316 = vmatmul.mubr.bf16.gmra.mxu0 %v281
    %v317 = vpop.f32.mrf.mxu0
    %v318 = vadd.f32 %v279, %v317
    %v319 = vpop.f32.mrf.mxu0
    %v320 = vpop.f32.mrf.mxu0
    %v321 = vpop.f32.mrf.mxu0
    %322 = vdwg.mxu0
    %323 = vst [vmem:[#allocation3] sm:$0x1] %v318
    // Predicated region
    $region30: #{tpu_custom_call.1} parent=1 // pred_check
      _
    $region31: #{tpu_custom_call.1} parent=1 // pred_check_branch
      %325 = sbr.rel (0) target = $region33
    $region32: #{tpu_custom_call.1} parent=1 // pred_region
      %s327 = ssub.s32 16, 16
      %328 = vsyncadd [#allocation4], %s327
      %s330 = sshll.u32 [#allocation3], 4
      %s331 = int_to_ptr.vmem [resolvable:$true] %s330
      %333 = dma.vmem_to_hbm [thread:$0]  %s331, 16, %s7, [#allocation4]
    $region33: #{tpu_custom_call.1} parent=1 // pred_fallthru
      _
    // Predicated region
    $region34: #{tpu_custom_call.1} parent=1 // pred_check
      _
    $region35: #{tpu_custom_call.1} parent=1 // pred_check_branch
      %335 = sbr.rel (0) target = $region37
    $region36: #{tpu_custom_call.1} parent=1 // pred_region
      %336 = dma.done [#allocation4], 16
    $region37: #{tpu_custom_call.1} parent=1 // pred_fallthru
      _
    %337 = vsyncpa [#allocation4], 1

</llo_original>
